<compile_context>
chip_gen: v7x
topology: tpu7x:2x2x1
jax: 0.10.0
libtpu: 0.0.40
codegen_flags: <defaults>
</compile_context>

<pallas_src>
import functools
import math

import jax
import jax.numpy as jnp
from jax import lax
from jax.experimental import pallas as pl
from jax.experimental.pallas import tpu as pltpu


# ---------------------------------------------------------------------------
# Sizing helpers
# ---------------------------------------------------------------------------
_TARGET_BLOCK_BYTES = 4 << 20     # ~4 MiB of (VMEM-padded) activation per block
_VMEM_LIMIT_FLOOR = 32 << 20      # explicit scoped-VMEM limit (fits every generation)
_VMEM_LIMIT_CAP = 48 << 20


def _round_down(x, m):
    return (x // m) * m


def _round_up(x, m):
    return -(-x // m) * m


def _sublane(itemsize):
    return {4: 8, 2: 16, 1: 32}.get(itemsize, 8)


def _pick_nchw_blocks(C, H, W, itemsize, target_bytes):
    """Choose (bc, bh) for an x block (1, bc, bh, W), budgeted in VMEM-padded bytes."""
    sub = _sublane(itemsize)
    w_pad = _round_up(W, 128)
    slab = _round_up(H, sub) * w_pad * itemsize      # one padded channel plane
    if C * slab <= target_bytes:
        return C, H
    if slab <= target_bytes:
        return max(1, int(target_bytes // slab)), H
    # per-channel plane too big: keep W full (always legal), tile H
    bh = _round_down(int(target_bytes // (w_pad * itemsize)), sub)
    bh = max(sub, bh)
    if bh >= H:
        bh = H
    return 1, bh


def _pick_2d_blocks(rows, lanes, itemsize, target_bytes):
    """Choose (tm, tl) for an x block (tm, tl); tl is a multiple of 128 or full."""
    sub = _sublane(itemsize)
    lane_budget = max(128, _round_down(int(target_bytes // (sub * itemsize)), 128))
    tl = lanes if lanes <= lane_budget else lane_budget
    tl_pad = _round_up(tl, 128)
    tm = max(sub, _round_down(int(target_bytes // (tl_pad * itemsize)), sub))
    if tm >= rows:
        tm = rows
    return int(tm), int(tl)


def _mosaic_params(num_grid_axes, vmem_need_bytes):
    vmem = int(min(max(vmem_need_bytes, _VMEM_LIMIT_FLOOR), _VMEM_LIMIT_CAP))
    # TODO(synk): evaluate pltpu.CORE_PARALLEL on the leading grid axis for v7x's two
    # TensorCores; plain "parallel" is kept because it is portable across v5e/v6e/v7x.
    return pltpu.CompilerParams(
        dimension_semantics=("parallel",) * num_grid_axes,
        vmem_limit_bytes=vmem,
    )


# ---------------------------------------------------------------------------
# Kernels
# ---------------------------------------------------------------------------
def _nchw_scale_kernel(noise_ref, x_ref, o_ref, *, bc, num_channels):
    """x/o block: (1, bc, bh, W); noise: the full (C,) f32 vector in SMEM.

    For each channel of the block: scalar (SMEM) * (bh, W) slab, computed in f32 and
    rounded once on store, so bf16 activations match the f32 reference.
    """
    c0 = pl.program_id(1) * bc

    def body(i, carry):
        c = jnp.minimum(c0 + i, num_channels - 1)     # clamp for the edge channel block
        s = noise_ref[c]                              # f32 per-channel scale (SMEM scalar)
        xi = x_ref[:, pl.ds(i, 1)].astype(jnp.float32)
        o_ref[:, pl.ds(i, 1)] = (xi * s).astype(o_ref.dtype)
        return carry

    lax.fori_loop(0, bc, body, 0, unroll=(bc <= 8))


def _colwise_scale_kernel(noise_ref, x_ref, o_ref):
    # noise_ref: (1, TL) f32 ; x_ref / o_ref: (TM, TL) -- broadcast the scale over the
    # rows, multiply in f32, round once on store.
    o_ref[...] = (x_ref[...].astype(jnp.float32) * noise_ref[...]).astype(o_ref.dtype)


# ---------------------------------------------------------------------------
# Wrappers
# ---------------------------------------------------------------------------
def channel_scale_nchw(x, noise_c, *, donate=False,
                       target_block_bytes=_TARGET_BLOCK_BYTES):
    """out[n, c, h, w] = x[n, c, h, w] * noise_c[c]  (native NCHW layout, no reshape)."""
    N, C, H, W = x.shape
    itemsize = jnp.dtype(x.dtype).itemsize
    sub = _sublane(itemsize)
    bc, bh = _pick_nchw_blocks(C, H, W, itemsize, target_block_bytes)
    grid = (N, pl.cdiv(C, bc), pl.cdiv(H, bh))

    # Double-buffered in + out blocks, in VMEM-padded bytes, + slack.
    blk = bc * _round_up(bh, sub) * _round_up(W, 128) * itemsize
    vmem_need = 2 * 2 * blk + (2 << 20)

    noise_f32 = noise_c.reshape(C).astype(jnp.float32)
    kernel = functools.partial(_nchw_scale_kernel, bc=bc, num_channels=C)

    kwargs = {}
    if donate:
        kwargs["input_output_aliases"] = {1: 0}       # x (input 1) aliases the output

    return pl.pallas_call(
        kernel,
        out_shape=jax.ShapeDtypeStruct(x.shape, x.dtype),
        grid_spec=pltpu.PrefetchScalarGridSpec(
            num_scalar_prefetch=0,
            grid=grid,
            in_specs=[
                # Tiny per-channel scale, resident in SMEM for the whole call.
                pl.BlockSpec(memory_space=pltpu.MemorySpace.SMEM),
                # Activation block in its native 4-D layout (no reshape -> no relayout).
                pl.BlockSpec((1, bc, bh, W), lambda n, c, h: (n, c, h, 0)),
            ],
            out_specs=pl.BlockSpec((1, bc, bh, W), lambda n, c, h: (n, c, h, 0)),
        ),
        compiler_params=_mosaic_params(len(grid), vmem_need),
        cost_estimate=pl.CostEstimate(
            flops=N * C * H * W, transcendentals=0,
            bytes_accessed=2 * N * C * H * W * itemsize + C * 4),
        **kwargs,
    )(noise_f32, x)


def _scale_lanes_2d(x2d, noise_row_f32, *, donate=False,
                    target_block_bytes=_TARGET_BLOCK_BYTES):
    """out[r, l] = x2d[r, l] * noise_row_f32[0, l]   (lane-wise scale, 2-D grid)."""
    rows, lanes = x2d.shape
    itemsize = jnp.dtype(x2d.dtype).itemsize
    sub = _sublane(itemsize)
    tm, tl = _pick_2d_blocks(rows, lanes, itemsize, target_block_bytes)
    grid = (pl.cdiv(rows, tm), pl.cdiv(lanes, tl))

    tl_pad = _round_up(tl, 128)
    blk = _round_up(tm, sub) * tl_pad * itemsize
    vmem_need = 2 * (2 * blk + 8 * tl_pad * 4) + (2 << 20)

    kwargs = {}
    if donate:
        kwargs["input_output_aliases"] = {1: 0}

    return pl.pallas_call(
        _colwise_scale_kernel,
        out_shape=jax.ShapeDtypeStruct((rows, lanes), x2d.dtype),
        grid_spec=pltpu.PrefetchScalarGridSpec(
            num_scalar_prefetch=0,
            grid=grid,
            in_specs=[
                pl.BlockSpec((1, tl), lambda i, j: (0, j)),     # resident noise row
                pl.BlockSpec((tm, tl), lambda i, j: (i, j)),    # activation tile
            ],
            out_specs=pl.BlockSpec((tm, tl), lambda i, j: (i, j)),
        ),
        compiler_params=_mosaic_params(len(grid), vmem_need),
        cost_estimate=pl.CostEstimate(
            flops=rows * lanes, transcendentals=0,
            bytes_accessed=2 * rows * lanes * itemsize + lanes * 4),
        **kwargs,
    )(noise_row_f32, x2d)


def channel_scale_2d(x_nc, noise_c, *, donate=False,
                     target_block_bytes=_TARGET_BLOCK_BYTES):
    """out[n, c] = x[n, c] * noise_c[c]   (fully-connected path)."""
    N, C = x_nc.shape
    noise_f32 = noise_c.reshape(C).astype(jnp.float32)

    # Lane-densifying row fold: for lane-sparse C (< 128) fold k rows into the lane
    # axis so the output last dim is a multiple of 128 (and >= ~512 when the batch
    # allows); the noise row is tiled k times so column j scales by noise[j % C].
    k = 1
    if 0 < C < 128:
        k = 128 // math.gcd(C, 128)
        if k > 1 and N % k == 0:
            while k * C < 512 and N % (2 * k) == 0:
                k *= 2
        else:
            k = 1

    if k > 1:
        x2 = x_nc.reshape(N // k, k * C)
        noise_row = jnp.tile(noise_f32, k).reshape(1, k * C)
        out = _scale_lanes_2d(x2, noise_row, donate=donate,
                              target_block_bytes=target_block_bytes)
        return out.reshape(N, C)

    noise_row = noise_f32.reshape(1, C)
    return _scale_lanes_2d(x_nc, noise_row, donate=donate,
                           target_block_bytes=target_block_bytes)


# ---------------------------------------------------------------------------
# DropoutLayer (JAX side) -- parameters initialized exactly like new_task()
# ---------------------------------------------------------------------------
class DropoutLayerPallas:
    def __init__(self, channels):
        self.channels = channels
        self.mu = []           # list of (C,) params
        self.log_sigma2 = []   # list of (C,) params
        self.masks = []        # list of (C,) buffers
        self.threshes = []
        self.best_log_alpha = None
        self.training = False

    def train(self):
        self.training = True
        return self

    def eval(self):
        self.training = False
        return self

    def new_task(self, thresh):
        self.mu.append(jnp.ones((self.channels,), jnp.float32))
        self.log_sigma2.append(-1.0 * jnp.ones((self.channels,), jnp.float32))
        self.masks.append(jnp.ones((self.channels,), jnp.float32))
        self.threshes.append(thresh)

    def log_alpha(self, task_id):
        return self.log_sigma2[task_id] - 2.0 * jnp.log(
            jnp.abs(self.mu[task_id]) + 1e-8)

    def _current_mask(self, task_id):
        return (self.log_alpha(task_id) < self.threshes[task_id]).astype(jnp.float32)

    def update_mask(self, task_id):
        # Eager Python-side mirror of the PyTorch buffer update.
        self.masks[task_id] = self._current_mask(task_id)

    def kl_reg(self, task_id):
        return jnp.sum(0.5 * jnp.log1p(
            self.mu[task_id] * self.mu[task_id]
            / (jnp.exp(self.log_sigma2[task_id]) + 1e-8)))

    def sparsity(self, task_id):
        la = self.log_alpha(task_id)
        return (float(jnp.sum(self.masks[task_id])), float(jnp.min(la)),
                float(jnp.max(la)))

    def update_best_log_alpha(self, task_id):
        la = self.log_alpha(task_id)
        self.best_log_alpha = la if self.best_log_alpha is None else jnp.minimum(
            self.best_log_alpha, la)

    def _apply(self, x, noise, donate=False):
        if x.ndim == 4:
            return channel_scale_nchw(x, noise, donate=donate)
        if x.ndim == 2:
            return channel_scale_2d(x, noise, donate=donate)
        # Generic fallback: noise broadcasts over the last axis (PyTorch semantics).
        lead = 1
        for d in x.shape[:-1]:
            lead *= d
        out = channel_scale_2d(x.reshape(lead, x.shape[-1]), noise, donate=donate)
        return out.reshape(x.shape)

    def forward(self, x, task_id, multi_sample=False, *, key=None, donate=False):
        if self.training or multi_sample:
            if key is None:
                raise ValueError("training / multi_sample forward() needs a PRNG `key`.")
            sigma = jnp.exp(0.5 * self.log_sigma2[task_id])
            eps = jax.random.normal(key, self.mu[task_id].shape, jnp.float32)
            noise = (self.mu[task_id] + sigma * eps) * self.masks[task_id]
        else:
            # Mask computed functionally from the current params (correct under jit);
            # the stored buffer is only an eager best-effort mirror of update_mask().
            mask = self._current_mask(task_id)
            self.masks[task_id] = mask
            noise = self.mu[task_id] * mask
        return self._apply(x, noise, donate=donate)

    __call__ = forward


# ---------------------------------------------------------------------------
# Demo / correctness checks
# ---------------------------------------------------------------------------
if __name__ == "__main__":
    root = jax.random.PRNGKey(0)
    kx, km, ks, ke, kb, kh, kf = jax.random.split(root, 7)

    N, C, H, W = 2, 4, 16, 16
    x = jax.random.normal(kx, (N, C, H, W), jnp.float32)

    layer = DropoutLayerPallas(channels=C)
    layer.new_task(thresh=0.5)
    # Non-trivial parameters so the checks are not multiply-by-one.
    layer.mu[0] = 1.0 + 0.5 * jax.random.normal(km, (C,), jnp.float32)
    layer.log_sigma2[0] = -1.0 + jax.random.normal(ks, (C,), jnp.float32)

    # --- eval path (deterministic mask branch) on NCHW ---
    layer.eval()
    out_eval = layer.forward(x, 0)
    jax.block_until_ready(out_eval)
    mask_ref = (layer.log_alpha(0) < 0.5).astype(jnp.float32)
    noise_ref = layer.mu[0] * mask_ref
    assert jnp.allclose(out_eval, x * noise_ref[None, :, None, None], atol=1e-6), \
        "eval/NCHW mismatch"

    # --- training path (sampled per-channel noise) ---
    layer.train()
    out_tr = layer.forward(x, 0, key=ke)
    jax.block_until_ready(out_tr)
    sigma = jnp.exp(0.5 * layer.log_sigma2[0])
    eps = jax.random.normal(ke, (C,), jnp.float32)
    noise_tr = (layer.mu[0] + sigma * eps) * layer.masks[0]
    assert jnp.allclose(out_tr, x * noise_tr[None, :, None, None], atol=1e-5), \
        "train/NCHW mismatch"
    layer.eval()

    # --- 2-D (fully-connected) path, no row->lane fold (N % k != 0) ---
    x2d = jax.random.normal(kf, (8, C), jnp.float32)
    out2d = layer.forward(x2d, 0)
    jax.block_until_ready(out2d)
    assert jnp.allclose(out2d, x2d * noise_ref[None, :], atol=1e-6), "eval/FC mismatch"

    # --- 2-D path with the lane-densifying row fold (N divisible by k) ---
    x2f = jax.random.normal(kf, (64, C), jnp.float32)
    out2f = layer.forward(x2f, 0)
    jax.block_until_ready(out2f)
    assert jnp.allclose(out2f, x2f * noise_ref[None, :], atol=1e-6), \
        "eval/FC folded mismatch"

    # --- bf16 activations: f32 compute in-kernel, rounded once on store ---
    xbf = x.astype(jnp.bfloat16)
    out_bf = layer.forward(xbf, 0)
    jax.block_until_ready(out_bf)
    ref_bf = (xbf.astype(jnp.float32) * noise_ref[None, :, None, None]).astype(jnp.bfloat16)
    assert jnp.allclose(out_bf.astype(jnp.float32), ref_bf.astype(jnp.float32),
                        atol=2e-2, rtol=2e-2), "bf16/NCHW mismatch"

    # --- multi-block grid with an edge channel block (C=88, bc=6 -> 15 C-blocks) ---
    C2 = 88
    xb = jax.random.normal(kb, (2, C2, 16, 16), jnp.float32)
    nzb = jax.random.normal(km, (C2,), jnp.float32)
    out_b = channel_scale_nchw(xb, nzb, target_block_bytes=48 << 10)
    jax.block_until_ready(out_b)
    assert jnp.allclose(out_b, xb * nzb[None, :, None, None], atol=1e-6), \
        "NCHW edge-C-block mismatch"

    # --- H-tiled grid (per-channel plane larger than the block target) ---
    xh = jax.random.normal(kh, (1, 3, 64, 128), jnp.float32)
    nzh = jax.random.normal(ks, (3,), jnp.float32)
    out_h = channel_scale_nchw(xh, nzh, target_block_bytes=16 << 10)
    jax.block_until_ready(out_h)
    assert jnp.allclose(out_h, xh * nzh[None, :, None, None], atol=1e-6), \
        "NCHW H-tiled mismatch"

    print("KERNEL_OK")
</pallas_src>

<mosaic_0001>
module attributes {stable_mosaic.version = 11 : i64} {
  func.func @_nchw_scale_kernel(%arg0: i32, %arg1: i32, %arg2: i32, %arg3: memref<4xf32, #tpu.memory_space<smem>>, %arg4: memref<1x4x16x16xf32, #tpu.memory_space<vmem>>, %arg5: memref<1x4x16x16xf32, #tpu.memory_space<vmem>>) attributes {dimension_semantics = [#tpu.dimension_semantics<parallel>, #tpu.dimension_semantics<parallel>, #tpu.dimension_semantics<parallel>], iteration_bounds = array<i64: 2, 1, 1>, scalar_prefetch = 0 : i64, scratch_operands = 0 : i64, tpu.core_type = #tpu.core_type<tc>, window_params = [{transform_indices = @transform_0, window_bounds = array<i64: 4>}, {transform_indices = @transform_1, window_bounds = array<i64: 1, 4, 16, 16>}, {transform_indices = @transform_2, window_bounds = array<i64: 1, 4, 16, 16>}]} {
    %c4_i32 = arith.constant 4 : i32
    %0 = arith.muli %arg1, %c4_i32 : i32
    %c0_i32 = arith.constant 0 : i32
    %1 = arith.addi %0, %c0_i32 : i32
    %c3_i32 = arith.constant 3 : i32
    %2 = arith.minsi %1, %c3_i32 : i32
    %3 = arith.index_cast %2 : i32 to index
    %4 = memref.load %arg3[%3] : memref<4xf32, #tpu.memory_space<smem>>
    %c0 = arith.constant 0 : index
    %5 = arith.index_cast %c0_i32 : i32 to index
    %c0_0 = arith.constant 0 : index
    %c0_1 = arith.constant 0 : index
    %6 = vector.load %arg4[%c0, %5, %c0_0, %c0_1] : memref<1x4x16x16xf32, #tpu.memory_space<vmem>>, vector<1x1x16x16xf32>
    %7 = vector.broadcast %4 : f32 to vector<1x1x16x16xf32>
    %8 = arith.mulf %6, %7 : vector<1x1x16x16xf32>
    %c0_2 = arith.constant 0 : index
    %9 = arith.index_cast %c0_i32 : i32 to index
    %c0_3 = arith.constant 0 : index
    %c0_4 = arith.constant 0 : index
    %10 = vector.load %arg5[%c0_2, %9, %c0_3, %c0_4] : memref<1x4x16x16xf32, #tpu.memory_space<vmem>>, vector<1x1x16x16xf32>
    tpu.vector_store %arg5[%c0_2, %9, %c0_3, %c0_4], %8 {strides = array<i32>} : memref<1x4x16x16xf32, #tpu.memory_space<vmem>>, vector<1x1x16x16xf32>,
    %c1_i32 = arith.constant 1 : i32
    %11 = arith.addi %0, %c1_i32 : i32
    %c3_i32_5 = arith.constant 3 : i32
    %12 = arith.minsi %11, %c3_i32_5 : i32
    %13 = arith.index_cast %12 : i32 to index
    %14 = memref.load %arg3[%13] : memref<4xf32, #tpu.memory_space<smem>>
    %c0_6 = arith.constant 0 : index
    %15 = arith.index_cast %c1_i32 : i32 to index
    %c0_7 = arith.constant 0 : index
    %c0_8 = arith.constant 0 : index
    %16 = vector.load %arg4[%c0_6, %15, %c0_7, %c0_8] : memref<1x4x16x16xf32, #tpu.memory_space<vmem>>, vector<1x1x16x16xf32>
    %17 = vector.broadcast %14 : f32 to vector<1x1x16x16xf32>
    %18 = arith.mulf %16, %17 : vector<1x1x16x16xf32>
    %c0_9 = arith.constant 0 : index
    %19 = arith.index_cast %c1_i32 : i32 to index
    %c0_10 = arith.constant 0 : index
    %c0_11 = arith.constant 0 : index
    %20 = vector.load %arg5[%c0_9, %19, %c0_10, %c0_11] : memref<1x4x16x16xf32, #tpu.memory_space<vmem>>, vector<1x1x16x16xf32>
    tpu.vector_store %arg5[%c0_9, %19, %c0_10, %c0_11], %18 {strides = array<i32>} : memref<1x4x16x16xf32, #tpu.memory_space<vmem>>, vector<1x1x16x16xf32>,
    %c2_i32 = arith.constant 2 : i32
    %21 = arith.addi %0, %c2_i32 : i32
    %c3_i32_12 = arith.constant 3 : i32
    %22 = arith.minsi %21, %c3_i32_12 : i32
    %23 = arith.index_cast %22 : i32 to index
    %24 = memref.load %arg3[%23] : memref<4xf32, #tpu.memory_space<smem>>
    %c0_13 = arith.constant 0 : index
    %25 = arith.index_cast %c2_i32 : i32 to index
    %c0_14 = arith.constant 0 : index
    %c0_15 = arith.constant 0 : index
    %26 = vector.load %arg4[%c0_13, %25, %c0_14, %c0_15] : memref<1x4x16x16xf32, #tpu.memory_space<vmem>>, vector<1x1x16x16xf32>
    %27 = vector.broadcast %24 : f32 to vector<1x1x16x16xf32>
    %28 = arith.mulf %26, %27 : vector<1x1x16x16xf32>
    %c0_16 = arith.constant 0 : index
    %29 = arith.index_cast %c2_i32 : i32 to index
    %c0_17 = arith.constant 0 : index
    %c0_18 = arith.constant 0 : index
    %30 = vector.load %arg5[%c0_16, %29, %c0_17, %c0_18] : memref<1x4x16x16xf32, #tpu.memory_space<vmem>>, vector<1x1x16x16xf32>
    tpu.vector_store %arg5[%c0_16, %29, %c0_17, %c0_18], %28 {strides = array<i32>} : memref<1x4x16x16xf32, #tpu.memory_space<vmem>>, vector<1x1x16x16xf32>,
    %c3_i32_19 = arith.constant 3 : i32
    %31 = arith.addi %0, %c3_i32_19 : i32
    %c3_i32_20 = arith.constant 3 : i32
    %32 = arith.minsi %31, %c3_i32_20 : i32
    %33 = arith.index_cast %32 : i32 to index
    %34 = memref.load %arg3[%33] : memref<4xf32, #tpu.memory_space<smem>>
    %c0_21 = arith.constant 0 : index
    %35 = arith.index_cast %c3_i32_19 : i32 to index
    %c0_22 = arith.constant 0 : index
    %c0_23 = arith.constant 0 : index
    %36 = vector.load %arg4[%c0_21, %35, %c0_22, %c0_23] : memref<1x4x16x16xf32, #tpu.memory_space<vmem>>, vector<1x1x16x16xf32>
    %37 = vector.broadcast %34 : f32 to vector<1x1x16x16xf32>
    %38 = arith.mulf %36, %37 : vector<1x1x16x16xf32>
    %c0_24 = arith.constant 0 : index
    %39 = arith.index_cast %c3_i32_19 : i32 to index
    %c0_25 = arith.constant 0 : index
    %c0_26 = arith.constant 0 : index
    %40 = vector.load %arg5[%c0_24, %39, %c0_25, %c0_26] : memref<1x4x16x16xf32, #tpu.memory_space<vmem>>, vector<1x1x16x16xf32>
    tpu.vector_store %arg5[%c0_24, %39, %c0_25, %c0_26], %38 {strides = array<i32>} : memref<1x4x16x16xf32, #tpu.memory_space<vmem>>, vector<1x1x16x16xf32>,
    %c4_i32_27 = arith.constant 4 : i32
    return
  }
  func.func @transform_0(%arg0: i32, %arg1: i32, %arg2: i32) -> i32 {
    %c0_i32 = arith.constant 0 : i32
    %c0_i32_0 = arith.constant 0 : i32
    return %c0_i32 : i32
  }
  func.func @transform_1(%arg0: i32, %arg1: i32, %arg2: i32) -> (i32, i32, i32, i32) {
    %c0_i32 = arith.constant 0 : i32
    %c0_i32_0 = arith.constant 0 : i32
    return %arg0, %arg1, %arg2, %c0_i32 : i32, i32, i32, i32
  }
  func.func @transform_2(%arg0: i32, %arg1: i32, %arg2: i32) -> (i32, i32, i32, i32) {
    %c0_i32 = arith.constant 0 : i32
    %c0_i32_0 = arith.constant 0 : i32
    return %arg0, %arg1, %arg2, %c0_i32 : i32, i32, i32, i32
  }
}

</mosaic_0001>

<llo_original>
// kernel: tpu_custom_call.1
$region0: #{tpu_custom_call.1}
  #allocation0 [shape = 'u32[]', space=smem, size = 0x4, offset = 0x4, fixed_abs, tag = 'smem constant byte address 0x4 - core index']
  #allocation1 [shape = 'u32[144,128]{1,0:T(1,128)}', space=vmem, size = 0x12000, scoped, tag = 'internal scratch']
  %s0 = inlined_call_operand.hbm [shape: f32[4], index: 0, kind: input, shape index: {}]
  %s1 = inlined_call_operand.hbm [shape: f32[2,4,16,16], index: 1, kind: input, shape index: {}]
  %s2 = inlined_call_operand.hbm [shape: f32[2,4,16,16], index: 2, kind: output, shape index: {}]
  %s3 = sld [smem:[#allocation0]]
  $region49: #{tpu_custom_call.1} parent=0
    _
  %s5 = ssub.s32 1, %s3
  %s6 = scalar_select 0, %s5, %s3
  $region1: #{tpu_custom_call.1} parent=0
    #allocation2 [shape = 'u8[512]{0}', space=smem, size = 0x200, scoped, tag = 'input window, operand 0, single buffered']
    #allocation3 [shape = 's32[2]{0}', space=sflag, size = 0x8, scoped, tag = 'scoped memory for tpu_custom_call.1']
    #allocation4 [shape = 's32[2]{0}', space=sflag, size = 0x8, scoped, tag = 'scoped memory for tpu_custom_call.1']
    #allocation5 [shape = 's32[2]{0}', space=sflag, size = 0x8, scoped, tag = 'scoped memory for tpu_custom_call.1']
    #allocation6 [shape = 'u8[65536]{0}', space=vmem, size = 0x10000, scoped, tag = 'input window, operand 1']
    #allocation7 [shape = 'u8[65536]{0}', space=vmem, size = 0x10000, scoped, tag = 'output window, operand 0']
    %7 = vsyncpa [#allocation5], 0
    %8 = vsyncpa [#allocation3], 0
    %s9 = scalar_lea.sflag [#allocation3], 1
    %10 = vsyncpa %s9, 0
    %11 = vsyncpa [#allocation4], 0
    %s12 = scalar_lea.sflag [#allocation4], 1
    %13 = vsyncpa %s12, 0
    loop: start=0, step=1, limit=4
    $region2: #{tpu_custom_call.1} parent=1 // loop_pre_header
      _
    $region3: #{tpu_custom_call.1} parent=1 // loop_header
      %s15 = sphi 0, %s19
      %p16 = scmp.ge.s32.totalorder %s15, 4
      %s22 = sphi 0, %s41
      %s23 = sphi 0, %s37
      %s24 = sphi 0, %s33
      %s25 = sphi 0, %s22
      %s26 = sphi 0, %s23
      %s27 = sphi 0, %s24
      %s28 = sphi 0, %s25
      %s29 = sphi 0, %s26
      %s30 = sphi 0, %s27
      %s42 = sphi 0, %s42
      %s44 = sphi 0, %s42
      %s45 = sphi 0, %s44
      %s59 = sphi 0, %s45
      %s69 = sphi 0, %s71
      %s72 = sphi 0, %s69
      %s73 = sphi 0, %s72
      %s89 = sphi 0, %s73
      %s99 = sphi 0, %s101
      %s102 = sphi 0, %s99
      %s103 = sphi 0, %s102
      %s119 = sphi 0, %s103
    $region4: #{tpu_custom_call.1} parent=1 // loop_header_branch
      %18 = sbr.rel (%p16) target = $region8
    $region5: #{tpu_custom_call.1} parent=1 // loop_body
      %s20 = ssub.s32 %s15, 1
      %s21 = ssub.s32 %s15, 2
      %s31 = sadd.s32 1, %s24
      %p32 = scmp.ge.s32.totalorder %s31, 1
      %s33 = scalar_select %p32, 0, %s31
      %s34 = sadd.s32 1, %s23
      %s35 = scalar_select %p32, %s34, %s23
      %p36 = scmp.ge.s32.totalorder %s35, 1
      %s37 = scalar_select %p36, 0, %s35
      %s38 = sadd.s32 1, %s22
      %s39 = scalar_select %p36, %s38, %s22
      %p40 = scmp.ge.s32.totalorder %s39, 2
      %s41 = scalar_select %p40, 0, %s39
      %s43 = sadd.s32 %s42, 1
      %p46 = scmp.eq.s32.totalorder %s15, 1
      %p47 = scmp.ne.s32.totalorder %s42, %s44
      %p48 = scmp.eq.s32.totalorder %s15, 0
      %p49 = por %p47, %p48
      %p50 = scmp.ne.s32.totalorder %s42, %s44
      %p51 = scmp.eq.s32.totalorder %s20, 1
      %p52 = por %p50, %p51
      %p53 = scmp.ne.s32.totalorder %s44, %s45
      %p54 = scmp.eq.s32.totalorder %s20, 0
      %p55 = por %p53, %p54
      %p56 = scmp.ne.s32.totalorder %s44, %s45
      %p57 = scmp.eq.s32.totalorder %s21, 1
      %p58 = por %p56, %p57
      %p60 = scmp.ne.s32.totalorder %s45, %s59
      %p61 = scmp.eq.s32.totalorder %s21, 0
      %p62 = por %p60, %p61
      %s63 = ssub.s32 %s22, %s41
      %s64 = ssub.s32 %s23, %s37
      %s65 = sor.u32 %s63, %s64
      %s66 = ssub.s32 %s24, %s33
      %s67 = sor.u32 %s65, %s66
      %p68 = scmp.eq.s32.totalorder %s67, 0
      %s70 = sadd.s32 %s69, 1
      %s71 = scalar_select %p68, %s69, %s70
      %p74 = pneg %p68
      %p75 = scmp.eq.s32.totalorder %s15, 1
      %p76 = por %p74, %p75
      %p77 = scmp.ne.s32.totalorder %s69, %s72
      %p78 = scmp.eq.s32.totalorder %s15, 0
      %p79 = por %p77, %p78
      %p80 = scmp.ne.s32.totalorder %s69, %s72
      %p81 = scmp.eq.s32.totalorder %s20, 1
      %p82 = por %p80, %p81
      %p83 = scmp.ne.s32.totalorder %s72, %s73
      %p84 = scmp.eq.s32.totalorder %s20, 0
      %p85 = por %p83, %p84
      %p86 = scmp.ne.s32.totalorder %s72, %s73
      %p87 = scmp.eq.s32.totalorder %s21, 1
      %p88 = por %p86, %p87
      %p90 = scmp.ne.s32.totalorder %s73, %s89
      %p91 = scmp.eq.s32.totalorder %s21, 0
      %p92 = por %p90, %p91
      %s93 = ssub.s32 %s22, %s41
      %s94 = ssub.s32 %s23, %s37
      %s95 = sor.u32 %s93, %s94
      %s96 = ssub.s32 %s24, %s33
      %s97 = sor.u32 %s95, %s96
      %p98 = scmp.eq.s32.totalorder %s97, 0
      %s100 = sadd.s32 %s99, 1
      %s101 = scalar_select %p98, %s99, %s100
      %p104 = pneg %p98
      %p105 = scmp.eq.s32.totalorder %s15, 1
      %p106 = por %p104, %p105
      %p107 = scmp.ne.s32.totalorder %s99, %s102
      %p108 = scmp.eq.s32.totalorder %s15, 0
      %p109 = por %p107, %p108
      %p110 = scmp.ne.s32.totalorder %s99, %s102
      %p111 = scmp.eq.s32.totalorder %s20, 1
      %p112 = por %p110, %p111
      %p113 = scmp.ne.s32.totalorder %s102, %s103
      %p114 = scmp.eq.s32.totalorder %s20, 0
      %p115 = por %p113, %p114
      %p116 = scmp.ne.s32.totalorder %s102, %s103
      %p117 = scmp.eq.s32.totalorder %s21, 1
      %p118 = por %p116, %p117
      %p120 = scmp.ne.s32.totalorder %s103, %s119
      %p121 = scmp.eq.s32.totalorder %s21, 0
      %p122 = por %p120, %p121
      %p123 = scmp.le.s32.totalorder 1, %s15
      %p124 = scmp.lt.s32.totalorder %s15, 3
      %p125 = pnand %p123, %p124
      %p126 = pneg %p125
      // Predicated region
      $region9: #{tpu_custom_call.1} parent=5 // pred_check
        _
      $region10: #{tpu_custom_call.1} parent=5 // pred_check_branch
        %128 = sbr.rel (%p125) target = $region12
      $region11: #{tpu_custom_call.1} parent=5 // pred_region
        %s129 = ssub.s32 %s15, 1
        // Predicated region
        $region13: #{tpu_custom_call.1} parent=11 // pred_check
          %p130 = pneg %p55
        $region14: #{tpu_custom_call.1} parent=11 // pred_check_branch
          %132 = sbr.rel (%p130) target = $region16
        $region15: #{tpu_custom_call.1} parent=11 // pred_region
          %s134 = ssub.s32 16, 16
          %135 = vsyncadd [#allocation5], %s134
          %138 = dma.hbm_to_smem %s0, 16, [#allocation2], [#allocation5]
        $region16: #{tpu_custom_call.1} parent=11 // pred_fallthru
          _
      $region12: #{tpu_custom_call.1} parent=5 // pred_fallthru
        _
      %p139 = scmp.lt.s32.totalorder %s15, 2
      // Predicated region
      $region17: #{tpu_custom_call.1} parent=5 // pred_check
        %p140 = pneg %p139
      $region18: #{tpu_custom_call.1} parent=5 // pred_check_branch
        %142 = sbr.rel (%p140) target = $region20
      $region19: #{tpu_custom_call.1} parent=5 // pred_region
        // Predicated region
        $region21: #{tpu_custom_call.1} parent=19 // pred_check
          %p143 = pneg %p79
        $region22: #{tpu_custom_call.1} parent=19 // pred_check_branch
          %145 = sbr.rel (%p143) target = $region24
        $region23: #{tpu_custom_call.1} parent=19 // pred_region
          %s146 = sand.u32 %s69, 1
          %s147 = scalar_lea.sflag [#allocation3], %s146
          %s148 = sand.u32 %s69, 1
          %s149 = smul.addr %s148, 64
          %s150 = scalar_lea.vmem [#allocation6], %s149
          %s151 = smul.u32 4, %s23
          %s152 = smul.u32 2, %s24
          %s154 = ssub.s32 1024, 1024
          %155 = vsyncadd %s147, %s154
          %s156 = smul.addr %s151, 2
          %s157 = sadd.s32 %s152, %s156
          %s158 = smul.addr %s22, 8
          %s159 = sadd.s32 %s157, %s158
          %s160 = smul.addr %s159, 128
          %s161 = scalar_lea.hbm %s1, %s160
          %s162 = sshll.u32 %s150, 4
          %s163 = int_to_ptr.vmem [resolvable:$true] %s162
          %168 = dma.hbm_to_vmem [thread:$0]  %s161, 1024, %s163, %s147, 128, 128, 8
        $region24: #{tpu_custom_call.1} parent=19 // pred_fallthru
          _
      $region20: #{tpu_custom_call.1} parent=5 // pred_fallthru
        _
      %p169 = scmp.le.s32.totalorder 1, %s15
      %p170 = scmp.lt.s32.totalorder %s15, 3
      %p171 = pnand %p169, %p170
      %p172 = pneg %p171
      // Predicated region
      $region25: #{tpu_custom_call.1} parent=5 // pred_check
        _
      $region26: #{tpu_custom_call.1} parent=5 // pred_check_branch
        %174 = sbr.rel (%p171) target = $region28
      $region27: #{tpu_custom_call.1} parent=5 // pred_region
        %s175 = ssub.s32 %s15, 1
        // Predicated region
        $region29: #{tpu_custom_call.1} parent=27 // pred_check
          %p176 = pneg %p55
        $region30: #{tpu_custom_call.1} parent=27 // pred_check_branch
          %178 = sbr.rel (%p176) target = $region32
        $region31: #{tpu_custom_call.1} parent=27 // pred_region
          %179 = dma.done [#allocation5], 16
        $region32: #{tpu_custom_call.1} parent=27 // pred_fallthru
          _
        %s180 = sand.u32 %s72, 1
        %s181 = scalar_lea.sflag [#allocation3], %s180
        %s182 = sand.u32 %s72, 1
        %s183 = smul.addr %s182, 64
        %s184 = scalar_lea.vmem [#allocation6], %s183
        // Predicated region
        $region33: #{tpu_custom_call.1} parent=27 // pred_check
          %p185 = pneg %p85
        $region34: #{tpu_custom_call.1} parent=27 // pred_check_branch
          %187 = sbr.rel (%p185) target = $region36
        $region35: #{tpu_custom_call.1} parent=27 // pred_region
          %188 = dma.done %s181, 1024
        $region36: #{tpu_custom_call.1} parent=27 // pred_fallthru
          _
        %189 = sfence
        %p190 = pneg %p55
        %p191 = pneg %p52
        %s192 = sand.u32 %s72, 1
        %s193 = scalar_lea.sflag [#allocation3], %s192
        %s194 = sand.u32 %s72, 1
        %s195 = smul.addr %s194, 64
        %s196 = scalar_lea.vmem [#allocation6], %s195
        %p197 = pneg %p85
        %p198 = pneg %p82
        %p199 = pneg %p115
        %p200 = pneg %p112
        %s201 = sand.u32 %s102, 1
        %s202 = scalar_lea.sflag [#allocation4], %s201
        %s203 = sand.u32 %s102, 1
        %s204 = smul.addr %s203, 64
        %s205 = scalar_lea.vmem [#allocation7], %s204
        %s206 = smul.u32 4, %s26
        %s207 = smul.u32 2, %s27
        %s208 = smul.u32 4, %s26
        %s209 = smul.u32 2, %s27
        %s210 = smul.u32 %s26, 4
        %p211 = scmp.lt.s32.totalorder %s210, 3
        %s212 = scalar_select %p211, %s210, 3
        %s213 = sld [smem:[#allocation2 + %s212]]
        %v214 = vld [vmem:[%s184] sm:$0xff]
        %v215 = vld [vmem:[%s184 + $0x8] sm:$0xff]
        %v216 = vstv %s213
        %v217 = vmul.f32 %v214, %v216
        %v218 = vmul.f32 %v215, %v216
        %vm219 = vcmask 130048
        %220 = vst.msk [vmem:[%s205] sm:$0xff] %vm219, %v217
        %221 = vst.msk [vmem:[%s205 + $0x8] sm:$0xff] %vm219, %v218
        %s222 = sadd.s32 %s210, 1
        %p223 = scmp.lt.s32.totalorder %s222, 3
        %s224 = scalar_select %p223, %s222, 3
        %s225 = sld [smem:[#allocation2 + %s224]]
        %s226 = scalar_lea.vmem %s184, 16 [#allocation6]
        %v227 = vld [vmem:[%s226] sm:$0xff]
        %v228 = vld [vmem:[%s226 + $0x8] sm:$0xff]
        %v229 = vstv %s225
        %v230 = vmul.f32 %v227, %v229
        %v231 = vmul.f32 %v228, %v229
        %s232 = scalar_lea.vmem %s205, 16 [#allocation7]
        %233 = vst.msk [vmem:[%s232] sm:$0xff] %vm219, %v230
        %234 = vst.msk [vmem:[%s232 + $0x8] sm:$0xff] %vm219, %v231
        %s235 = sadd.s32 %s210, 2
        %p236 = scmp.lt.s32.totalorder %s235, 3
        %s237 = scalar_select %p236, %s235, 3
        %s238 = sld [smem:[#allocation2 + %s237]]
        %s239 = scalar_lea.vmem %s184, 32 [#allocation6]
        %v240 = vld [vmem:[%s239] sm:$0xff]
        %v241 = vld [vmem:[%s239 + $0x8] sm:$0xff]
        %v242 = vstv %s238
        %v243 = vmul.f32 %v240, %v242
        %v244 = vmul.f32 %v241, %v242
        %s245 = scalar_lea.vmem %s205, 32 [#allocation7]
        %246 = vst.msk [vmem:[%s245] sm:$0xff] %vm219, %v243
        %247 = vst.msk [vmem:[%s245 + $0x8] sm:$0xff] %vm219, %v244
        %s248 = sadd.s32 %s210, 3
        %p249 = scmp.lt.s32.totalorder %s248, 3
        %s250 = scalar_select %p249, %s248, 3
        %s251 = sld [smem:[#allocation2 + %s250]]
        %s252 = scalar_lea.vmem %s184, 48 [#allocation6]
        %v253 = vld [vmem:[%s252] sm:$0xff]
        %v254 = vld [vmem:[%s252 + $0x8] sm:$0xff]
        %v255 = vstv %s251
        %v256 = vmul.f32 %v253, %v255
        %v257 = vmul.f32 %v254, %v255
        %s258 = scalar_lea.vmem %s205, 48 [#allocation7]
        %259 = vst.msk [vmem:[%s258] sm:$0xff] %vm219, %v256
        %260 = vst.msk [vmem:[%s258 + $0x8] sm:$0xff] %vm219, %v257
        %s261 = sand.u32 %s102, 1
        %s262 = scalar_lea.sflag [#allocation4], %s261
        %s263 = sand.u32 %s102, 1
        %s264 = smul.addr %s263, 64
        %s265 = scalar_lea.vmem [#allocation7], %s264
        // Predicated region
        $region37: #{tpu_custom_call.1} parent=27 // pred_check
          %p266 = pneg %p112
        $region38: #{tpu_custom_call.1} parent=27 // pred_check_branch
          %268 = sbr.rel (%p266) target = $region40
        $region39: #{tpu_custom_call.1} parent=27 // pred_region
          %s269 = smul.u32 4, %s26
          %s270 = smul.u32 2, %s27
          %s272 = ssub.s32 1024, 1024
          %273 = vsyncadd %s262, %s272
          %s274 = smul.addr %s269, 2
          %s275 = sadd.s32 %s270, %s274
          %s276 = smul.addr %s25, 8
          %s277 = sadd.s32 %s275, %s276
          %s278 = smul.addr %s277, 128
          %s279 = scalar_lea.hbm %s2, %s278
          %s280 = sshll.u32 %s265, 4
          %s281 = int_to_ptr.vmem [resolvable:$true] %s280
          %286 = dma.vmem_to_hbm [thread:$0]  %s281, 1024, %s279, %s262, 128, 128, 8
        $region40: #{tpu_custom_call.1} parent=27 // pred_fallthru
          _
      $region28: #{tpu_custom_call.1} parent=5 // pred_fallthru
        _
      %p287 = scmp.le.s32.totalorder 2, %s15
      // Predicated region
      $region41: #{tpu_custom_call.1} parent=5 // pred_check
        %p288 = pneg %p287
      $region42: #{tpu_custom_call.1} parent=5 // pred_check_branch
        %290 = sbr.rel (%p288) target = $region44
      $region43: #{tpu_custom_call.1} parent=5 // pred_region
        %s291 = ssub.s32 %s15, 2
        // Predicated region
        $region45: #{tpu_custom_call.1} parent=43 // pred_check
          %p292 = pneg %p118
        $region46: #{tpu_custom_call.1} parent=43 // pred_check_branch
          %294 = sbr.rel (%p292) target = $region48
        $region47: #{tpu_custom_call.1} parent=43 // pred_region
          %s295 = sand.u32 %s103, 1
          %s296 = scalar_lea.sflag [#allocation4], %s295
          %s297 = sand.u32 %s103, 1
          %s298 = smul.addr %s297, 64
          %s299 = scalar_lea.vmem [#allocation7], %s298
          %300 = dma.done %s296, 1024
        $region48: #{tpu_custom_call.1} parent=43 // pred_fallthru
          _
      $region44: #{tpu_custom_call.1} parent=5 // pred_fallthru
        _
    $region6: #{tpu_custom_call.1} parent=1 // loop_footer
      %s19 = sadd.s32 1, %s15
    $region7: #{tpu_custom_call.1} parent=1 // loop_footer_branch
      %14 = sbr.rel target = $region3
    $region8: #{tpu_custom_call.1} parent=1 // loop_exit
      _
    %301 = vsyncpa [#allocation3], 1
    %s302 = scalar_lea.sflag [#allocation3], 1
    %303 = vsyncpa %s302, 1
    %304 = vsyncpa [#allocation4], 1
    %s305 = scalar_lea.sflag [#allocation4], 1
    %306 = vsyncpa %s305, 1
    %307 = vsyncpa [#allocation5], 1
    %s308 = scalar_lea.sflag [#allocation5], 1
    %309 = vsyncpa %s308, 1

</llo_original>
